<compile_context>
chip_gen: v7x
topology: tpu7x:2x2x1
jax: 0.10.0
libtpu: 0.0.40
codegen_flags: <defaults>
</compile_context>

<pallas_src>
import math

import jax
import jax.numpy as jnp
from jax.experimental import pallas as pl
from jax.experimental.pallas import tpu as pltpu

N_INPUTS = 18
N_HIDDEN = 128
N_OUTPUTS = 9

# Max rows of the batch handled per grid step (multiple of 128).
DEFAULT_BLOCK_BATCH = 2048


def _round_up(a: int, b: int) -> int:
    return (a + b - 1) // b * b


def _cdiv(a: int, b: int) -> int:
    return (a + b - 1) // b


def dqn_kernel(xt_ref, w1_ref, b1_ref, w2_ref, b2_ref, w3_ref, b3_ref, out_ref):
    """Feature-major fused MLP.

    xt_ref : (18, bm)   bf16   -- x^T tile (batch on the lane axis)
    w*_ref : (out, in)  bf16   -- resident weights (PyTorch layout)
    b*_ref : (out, 1)   f32    -- resident biases
    out_ref: (9, bm)    f32    -- logits^T tile (lane-dense stores)
    """
    # h1^T = relu(W1 @ x^T + b1)   -- bf16 MXU operands, f32 accumulation.
    h1 = jnp.dot(w1_ref[...], xt_ref[...],
                 preferred_element_type=jnp.float32) + b1_ref[...]
    h1 = jnp.maximum(h1, 0.0)

    # h2^T = relu(W2 @ h1^T + b2)
    h2 = jnp.dot(w2_ref[...], h1.astype(jnp.bfloat16),
                 preferred_element_type=jnp.float32) + b2_ref[...]
    h2 = jnp.maximum(h2, 0.0)

    # logits^T = W3 @ h2^T + b3   (no activation)
    out_ref[...] = jnp.dot(w3_ref[...], h2.astype(jnp.bfloat16),
                           preferred_element_type=jnp.float32) + b3_ref[...]


def dqn_forward(x, params, *, block_batch: int = DEFAULT_BLOCK_BATCH):
    """Fused 3-layer MLP.  Returns (logits[batch, 9] f32, actions[batch, 1] i32).

    The batch is tiled with a 1-D 'parallel' grid (>= 2 tiles whenever the
    batch is large enough, so both v7x TensorCores are used); weights/biases
    are resident in VMEM via constant index_maps while x^T / logits^T are
    pipelined tile by tile.
    """
    w1, b1, w2, b2, w3, b3 = params
    batch = x.shape[0]

    # Balanced, 128-aligned batch tile.
    num_tiles = max(1, _cdiv(batch, block_batch))
    if num_tiles == 1 and batch > 256:
        num_tiles = 2                      # keep both v7x TensorCores busy
    bm = _round_up(_cdiv(batch, num_tiles), 128)
    padded = bm * num_tiles
    grid = (num_tiles,)

    # x.float() then bf16 MXU operand; transpose to feature-major and pad the
    # batch (lane) axis.  These are cheap XLA ops on a (batch, 18) array.
    xt = x.astype(jnp.float32).astype(jnp.bfloat16).T        # (18, batch)
    if padded != batch:
        xt = jnp.pad(xt, ((0, 0), (0, padded - batch)))

    # Pre-cast resident weights to bf16 (halves their DMA/VMEM, removes
    # per-grid-step VPU casts).  Biases stay f32 for the f32 epilogue.
    w1b = w1.astype(jnp.bfloat16)
    w2b = w2.astype(jnp.bfloat16)
    w3b = w3.astype(jnp.bfloat16)

    const = lambda i: (0, 0)       # weights/biases resident across the grid
    tiled = lambda i: (0, i)       # x^T / logits^T walk the batch (lane) axis

    flops = 2 * padded * (N_INPUTS * N_HIDDEN
                          + N_HIDDEN * N_HIDDEN
                          + N_HIDDEN * N_OUTPUTS)
    bytes_accessed = (xt.size * 2                              # x^T bf16 in
                      + (w1b.size + w2b.size + w3b.size) * 2   # bf16 weights
                      + (b1.size + b2.size + b3.size) * 4      # f32 biases
                      + padded * N_OUTPUTS * 4)                # logits^T out

    logits_t = pl.pallas_call(
        dqn_kernel,
        out_shape=jax.ShapeDtypeStruct((N_OUTPUTS, padded), jnp.float32),
        grid=grid,
        in_specs=[
            pl.BlockSpec((N_INPUTS, bm), tiled),
            pl.BlockSpec((N_HIDDEN, N_INPUTS), const),
            pl.BlockSpec((N_HIDDEN, 1), const),
            pl.BlockSpec((N_HIDDEN, N_HIDDEN), const),
            pl.BlockSpec((N_HIDDEN, 1), const),
            pl.BlockSpec((N_OUTPUTS, N_HIDDEN), const),
            pl.BlockSpec((N_OUTPUTS, 1), const),
        ],
        out_specs=pl.BlockSpec((N_OUTPUTS, bm), tiled),
        compiler_params=pltpu.CompilerParams(
            dimension_semantics=("parallel",),   # megacore-shardable on v7x
        ),
        cost_estimate=pl.CostEstimate(
            flops=flops, transcendentals=0, bytes_accessed=bytes_accessed),
    )(xt, w1b, b1, w2b, b2, w3b, b3)

    # Back to batch-major, drop padded columns.
    logits = logits_t[:, :batch].T                             # (batch, 9)

    # DQN.act(): greedy action = first index of the max logit (== .max(1)[1]).
    actions = jnp.argmax(logits, axis=1).astype(jnp.int32)[:, None]
    return logits, actions


def init_params(key):
    """Deterministic init mimicking PyTorch nn.Linear default:
    U(-1/sqrt(fan_in), 1/sqrt(fan_in)) for both weight and bias.
    Weights stored in PyTorch layout (out_features, in_features), biases (out, 1)."""
    keys = jax.random.split(key, 6)

    def linear(kw, kb, fan_in, fan_out):
        bound = 1.0 / math.sqrt(fan_in)
        w = jax.random.uniform(
            kw, (fan_out, fan_in), jnp.float32, minval=-bound, maxval=bound)
        b = jax.random.uniform(
            kb, (fan_out, 1), jnp.float32, minval=-bound, maxval=bound)
        return w, b

    w1, b1 = linear(keys[0], keys[1], N_INPUTS, N_HIDDEN)
    w2, b2 = linear(keys[2], keys[3], N_HIDDEN, N_HIDDEN)
    w3, b3 = linear(keys[4], keys[5], N_HIDDEN, N_OUTPUTS)
    return (w1, b1, w2, b2, w3, b3)


def dqn_reference(x, params):
    """Pure-JAX f32 reference for correctness checking."""
    w1, b1, w2, b2, w3, b3 = params
    h1 = jnp.maximum(x.astype(jnp.float32) @ w1.T + b1[:, 0], 0.0)
    h2 = jnp.maximum(h1 @ w2.T + b2[:, 0], 0.0)
    return h2 @ w3.T + b3[:, 0]


# TODO(synk): Adam optimizer / SmoothL1Loss training step from the PyTorch
# module are not part of the forward pass and are not implemented here.

if __name__ == "__main__":
    key = jax.random.PRNGKey(0)
    k_params, k_x1, k_x2 = jax.random.split(key, 3)

    params = init_params(k_params)

    # Small batch (single tile).
    batch = 2
    x = jax.random.normal(k_x1, (batch, N_INPUTS), dtype=jnp.float32)
    logits, actions = dqn_forward(x, params)
    logits = jax.block_until_ready(logits)
    actions = jax.block_until_ready(actions)

    assert logits.shape == (batch, N_OUTPUTS)
    assert actions.shape == (batch, 1)

    # bf16 matmul operands (f32 accumulate) -> loosened tolerance vs f32 ref.
    ref = dqn_reference(x, params)
    assert jnp.allclose(logits, ref, atol=2e-2, rtol=2e-2), "logits mismatch"
    assert jnp.array_equal(
        actions[:, 0], jnp.argmax(logits, axis=1).astype(jnp.int32)
    ), "action mismatch"

    # Slightly larger batch to exercise multi-tile grid + padded tail columns.
    batch2 = 300
    x2 = jax.random.normal(k_x2, (batch2, N_INPUTS), dtype=jnp.float32)
    logits2, actions2 = dqn_forward(x2, params)
    logits2 = jax.block_until_ready(logits2)
    actions2 = jax.block_until_ready(actions2)

    assert logits2.shape == (batch2, N_OUTPUTS)
    assert actions2.shape == (batch2, 1)
    ref2 = dqn_reference(x2, params)
    assert jnp.allclose(logits2, ref2, atol=2e-2, rtol=2e-2), "logits mismatch (multi-tile)"

    print("KERNEL_OK")
</pallas_src>

<mosaic_0001>
module attributes {stable_mosaic.version = 11 : i64} {
  func.func @dqn_kernel(%arg0: i32, %arg1: memref<18x128xbf16, #tpu.memory_space<vmem>>, %arg2: memref<128x18xbf16, #tpu.memory_space<vmem>>, %arg3: memref<128x1xf32, #tpu.memory_space<vmem>>, %arg4: memref<128x128xbf16, #tpu.memory_space<vmem>>, %arg5: memref<128x1xf32, #tpu.memory_space<vmem>>, %arg6: memref<9x128xbf16, #tpu.memory_space<vmem>>, %arg7: memref<9x1xf32, #tpu.memory_space<vmem>>, %arg8: memref<9x128xf32, #tpu.memory_space<vmem>>) attributes {dimension_semantics = [#tpu.dimension_semantics<parallel>], iteration_bounds = array<i64: 1>, scalar_prefetch = 0 : i64, scratch_operands = 0 : i64, tpu.core_type = #tpu.core_type<tc>, window_params = [{transform_indices = @transform_0, window_bounds = array<i64: 18, 128>}, {pipeline_mode = #tpu.pipeline_mode<synchronous>, transform_indices = @transform_1, window_bounds = array<i64: 128, 18>}, {pipeline_mode = #tpu.pipeline_mode<synchronous>, transform_indices = @transform_2, window_bounds = array<i64: 128, 1>}, {pipeline_mode = #tpu.pipeline_mode<synchronous>, transform_indices = @transform_3, window_bounds = array<i64: 128, 128>}, {pipeline_mode = #tpu.pipeline_mode<synchronous>, transform_indices = @transform_4, window_bounds = array<i64: 128, 1>}, {pipeline_mode = #tpu.pipeline_mode<synchronous>, transform_indices = @transform_5, window_bounds = array<i64: 9, 128>}, {pipeline_mode = #tpu.pipeline_mode<synchronous>, transform_indices = @transform_6, window_bounds = array<i64: 9, 1>}, {transform_indices = @transform_7, window_bounds = array<i64: 9, 128>}]} {
    %c0 = arith.constant 0 : index
    %c0_0 = arith.constant 0 : index
    %0 = vector.load %arg2[%c0, %c0_0] : memref<128x18xbf16, #tpu.memory_space<vmem>>, vector<128x18xbf16>
    %c0_1 = arith.constant 0 : index
    %c0_2 = arith.constant 0 : index
    %1 = vector.load %arg1[%c0_1, %c0_2] : memref<18x128xbf16, #tpu.memory_space<vmem>>, vector<18x128xbf16>
    %cst = arith.constant dense<0.000000e+00> : vector<128x128xf32>
    %2 = tpu.matmul %0, %1, %cst {dimension_numbers = #tpu.dot_dimension_numbers<[1], [0], [0], [1], [0, 0, 1, 1], [], []>} : vector<128x18xbf16>, vector<18x128xbf16>, vector<128x128xf32> -> vector<128x128xf32>
    %c0_3 = arith.constant 0 : index
    %c0_4 = arith.constant 0 : index
    %3 = vector.load %arg3[%c0_3, %c0_4] : memref<128x1xf32, #tpu.memory_space<vmem>>, vector<128x1xf32>
    %4 = vector.broadcast %3 : vector<128x1xf32> to vector<128x128xf32>
    %5 = arith.addf %2, %4 : vector<128x128xf32>
    %cst_5 = arith.constant 0.000000e+00 : f32
    %6 = vector.broadcast %cst_5 : f32 to vector<128x128xf32>
    %7 = arith.maximumf %5, %6 : vector<128x128xf32>
    %c0_6 = arith.constant 0 : index
    %c0_7 = arith.constant 0 : index
    %8 = vector.load %arg4[%c0_6, %c0_7] : memref<128x128xbf16, #tpu.memory_space<vmem>>, vector<128x128xbf16>
    %9 = arith.truncf %7 : vector<128x128xf32> to vector<128x128xbf16>
    %cst_8 = arith.constant dense<0.000000e+00> : vector<128x128xf32>
    %10 = tpu.matmul %8, %9, %cst_8 {dimension_numbers = #tpu.dot_dimension_numbers<[1], [0], [0], [1], [0, 0, 1, 1], [], []>} : vector<128x128xbf16>, vector<128x128xbf16>, vector<128x128xf32> -> vector<128x128xf32>
    %c0_9 = arith.constant 0 : index
    %c0_10 = arith.constant 0 : index
    %11 = vector.load %arg5[%c0_9, %c0_10] : memref<128x1xf32, #tpu.memory_space<vmem>>, vector<128x1xf32>
    %12 = vector.broadcast %11 : vector<128x1xf32> to vector<128x128xf32>
    %13 = arith.addf %10, %12 : vector<128x128xf32>
    %cst_11 = arith.constant 0.000000e+00 : f32
    %14 = vector.broadcast %cst_11 : f32 to vector<128x128xf32>
    %15 = arith.maximumf %13, %14 : vector<128x128xf32>
    %c0_12 = arith.constant 0 : index
    %c0_13 = arith.constant 0 : index
    %16 = vector.load %arg6[%c0_12, %c0_13] : memref<9x128xbf16, #tpu.memory_space<vmem>>, vector<9x128xbf16>
    %17 = arith.truncf %15 : vector<128x128xf32> to vector<128x128xbf16>
    %cst_14 = arith.constant dense<0.000000e+00> : vector<9x128xf32>
    %18 = tpu.matmul %16, %17, %cst_14 {dimension_numbers = #tpu.dot_dimension_numbers<[1], [0], [0], [1], [0, 0, 1, 1], [], []>} : vector<9x128xbf16>, vector<128x128xbf16>, vector<9x128xf32> -> vector<9x128xf32>
    %c0_15 = arith.constant 0 : index
    %c0_16 = arith.constant 0 : index
    %19 = vector.load %arg7[%c0_15, %c0_16] : memref<9x1xf32, #tpu.memory_space<vmem>>, vector<9x1xf32>
    %20 = vector.broadcast %19 : vector<9x1xf32> to vector<9x128xf32>
    %21 = arith.addf %18, %20 : vector<9x128xf32>
    %c0_17 = arith.constant 0 : index
    %c0_18 = arith.constant 0 : index
    %22 = vector.load %arg8[%c0_17, %c0_18] : memref<9x128xf32, #tpu.memory_space<vmem>>, vector<9x128xf32>
    tpu.vector_store %arg8[%c0_17, %c0_18], %21 {strides = array<i32>} : memref<9x128xf32, #tpu.memory_space<vmem>>, vector<9x128xf32>,
    return
  }
  func.func @transform_0(%arg0: i32) -> (i32, i32) {
    %c0_i32 = arith.constant 0 : i32
    %c0_i32_0 = arith.constant 0 : i32
    return %c0_i32, %arg0 : i32, i32
  }
  func.func @transform_1(%arg0: i32) -> (i32, i32) {
    %c0_i32 = arith.constant 0 : i32
    %c0_i32_0 = arith.constant 0 : i32
    %c0_i32_1 = arith.constant 0 : i32
    return %c0_i32, %c0_i32_0 : i32, i32
  }
  func.func @transform_2(%arg0: i32) -> (i32, i32) {
    %c0_i32 = arith.constant 0 : i32
    %c0_i32_0 = arith.constant 0 : i32
    %c0_i32_1 = arith.constant 0 : i32
    return %c0_i32, %c0_i32_0 : i32, i32
  }
  func.func @transform_3(%arg0: i32) -> (i32, i32) {
    %c0_i32 = arith.constant 0 : i32
    %c0_i32_0 = arith.constant 0 : i32
    %c0_i32_1 = arith.constant 0 : i32
    return %c0_i32, %c0_i32_0 : i32, i32
  }
  func.func @transform_4(%arg0: i32) -> (i32, i32) {
    %c0_i32 = arith.constant 0 : i32
    %c0_i32_0 = arith.constant 0 : i32
    %c0_i32_1 = arith.constant 0 : i32
    return %c0_i32, %c0_i32_0 : i32, i32
  }
  func.func @transform_5(%arg0: i32) -> (i32, i32) {
    %c0_i32 = arith.constant 0 : i32
    %c0_i32_0 = arith.constant 0 : i32
    %c0_i32_1 = arith.constant 0 : i32
    return %c0_i32, %c0_i32_0 : i32, i32
  }
  func.func @transform_6(%arg0: i32) -> (i32, i32) {
    %c0_i32 = arith.constant 0 : i32
    %c0_i32_0 = arith.constant 0 : i32
    %c0_i32_1 = arith.constant 0 : i32
    return %c0_i32, %c0_i32_0 : i32, i32
  }
  func.func @transform_7(%arg0: i32) -> (i32, i32) {
    %c0_i32 = arith.constant 0 : i32
    %c0_i32_0 = arith.constant 0 : i32
    return %c0_i32, %arg0 : i32, i32
  }
}

</mosaic_0001>

<llo_original>
// kernel: tpu_custom_call.1
$region0: #{tpu_custom_call.1}
  #allocation0 [shape = 'u32[]', space=smem, size = 0x4, offset = 0x4, fixed_abs, tag = 'smem constant byte address 0x4 - core index']
  #allocation1 [shape = 'u32[144,128]{1,0:T(1,128)}', space=vmem, size = 0x12000, scoped, tag = 'internal scratch']
  %s0 = inlined_call_operand.vmem [shape: bf16[18,128], index: 0, kind: input, shape index: {}]
  %s1 = inlined_call_operand.vmem [shape: bf16[128,18], index: 1, kind: input, shape index: {}]
  %s2 = inlined_call_operand.vmem [shape: f32[128,1], index: 2, kind: input, shape index: {}]
  %s3 = inlined_call_operand.vmem [shape: bf16[128,128], index: 3, kind: input, shape index: {}]
  %s4 = inlined_call_operand.vmem [shape: f32[128,1], index: 4, kind: input, shape index: {}]
  %s5 = inlined_call_operand.vmem [shape: bf16[9,128], index: 5, kind: input, shape index: {}]
  %s6 = inlined_call_operand.vmem [shape: f32[9,1], index: 6, kind: input, shape index: {}]
  %s7 = inlined_call_operand.hbm [shape: f32[9,128], index: 7, kind: output, shape index: {}]
  %s8 = sld [smem:[#allocation0]]
  $region38: #{tpu_custom_call.1} parent=0
    _
  %s10 = ssub.s32 1, %s8
  %s11 = scalar_select 0, %s10, %s8
  $region1: #{tpu_custom_call.1} parent=0
    #allocation2 [shape = 'u8[8192]{0}', space=vmem, size = 0x2000, scoped, tag = 'output window, operand 0, single buffered']
    #allocation3 [shape = 's32[1]{0}', space=sflag, size = 0x4, scoped, tag = 'scoped memory for tpu_custom_call.1']
    %12 = vsyncpa [#allocation3], 0
    // Predicated region
    $region2: #{tpu_custom_call.1} parent=1 // pred_check
      _
    $region3: #{tpu_custom_call.1} parent=1 // pred_check_branch
      %14 = sbr.rel (0) target = $region5
    $region4: #{tpu_custom_call.1} parent=1 // pred_region
      _
    $region5: #{tpu_custom_call.1} parent=1 // pred_fallthru
      _
    // Predicated region
    $region6: #{tpu_custom_call.1} parent=1 // pred_check
      _
    $region7: #{tpu_custom_call.1} parent=1 // pred_check_branch
      %16 = sbr.rel (0) target = $region9
    $region8: #{tpu_custom_call.1} parent=1 // pred_region
      _
    $region9: #{tpu_custom_call.1} parent=1 // pred_fallthru
      _
    // Predicated region
    $region10: #{tpu_custom_call.1} parent=1 // pred_check
      _
    $region11: #{tpu_custom_call.1} parent=1 // pred_check_branch
      %18 = sbr.rel (0) target = $region13
    $region12: #{tpu_custom_call.1} parent=1 // pred_region
      _
    $region13: #{tpu_custom_call.1} parent=1 // pred_fallthru
      _
    // Predicated region
    $region14: #{tpu_custom_call.1} parent=1 // pred_check
      _
    $region15: #{tpu_custom_call.1} parent=1 // pred_check_branch
      %20 = sbr.rel (0) target = $region17
    $region16: #{tpu_custom_call.1} parent=1 // pred_region
      _
    $region17: #{tpu_custom_call.1} parent=1 // pred_fallthru
      _
    // Predicated region
    $region18: #{tpu_custom_call.1} parent=1 // pred_check
      _
    $region19: #{tpu_custom_call.1} parent=1 // pred_check_branch
      %22 = sbr.rel (0) target = $region21
    $region20: #{tpu_custom_call.1} parent=1 // pred_region
      _
    $region21: #{tpu_custom_call.1} parent=1 // pred_fallthru
      _
    // Predicated region
    $region22: #{tpu_custom_call.1} parent=1 // pred_check
      _
    $region23: #{tpu_custom_call.1} parent=1 // pred_check_branch
      %24 = sbr.rel (0) target = $region25
    $region24: #{tpu_custom_call.1} parent=1 // pred_region
      _
    $region25: #{tpu_custom_call.1} parent=1 // pred_fallthru
      _
    // Predicated region
    $region26: #{tpu_custom_call.1} parent=1 // pred_check
      _
    $region27: #{tpu_custom_call.1} parent=1 // pred_check_branch
      %26 = sbr.rel (0) target = $region29
    $region28: #{tpu_custom_call.1} parent=1 // pred_region
      _
    $region29: #{tpu_custom_call.1} parent=1 // pred_fallthru
      _
    %v28 = vld [vmem:[%s1] sm:$0xf]
    %v29 = vld [vmem:[%s1 + $0x4] sm:$0xf]
    %v30 = vld [vmem:[%s1 + $0x8] sm:$0xf]
    %v31 = vld [vmem:[%s1 + $0xc] sm:$0xf]
    %v32 = vld [vmem:[%s1 + $0x10] sm:$0xf]
    %v33 = vld [vmem:[%s1 + $0x14] sm:$0xf]
    %v34 = vld [vmem:[%s1 + $0x18] sm:$0xf]
    %v35 = vld [vmem:[%s1 + $0x1c] sm:$0xf]
    %v36 = vld [vmem:[%s1 + $0x20] sm:$0xf]
    %v37 = vld [vmem:[%s1 + $0x24] sm:$0xf]
    %v38 = vld [vmem:[%s1 + $0x28] sm:$0xf]
    %v39 = vld [vmem:[%s1 + $0x2c] sm:$0xf]
    %v40 = vld [vmem:[%s1 + $0x30] sm:$0xf]
    %v41 = vld [vmem:[%s1 + $0x34] sm:$0xf]
    %v42 = vld [vmem:[%s1 + $0x38] sm:$0xf]
    %v43 = vld [vmem:[%s1 + $0x3c] sm:$0xf]
    %v44 = vld [vmem:[%s0] sm:$0xf]
    %v45 = vld [vmem:[%s0 + $0x4] sm:$0xf]
    %v46 = vld [vmem:[%s0 + $0x8] sm:$0x1]
    %v47 = vld [vmem:[%s2] sm:$0xff]
    %v48 = vld [vmem:[%s2 + $0x8] sm:$0xff]
    %v49 = vld [vmem:[%s2 + $0x10] sm:$0xff]
    %v50 = vld [vmem:[%s2 + $0x18] sm:$0xff]
    %v51 = vld [vmem:[%s2 + $0x20] sm:$0xff]
    %v52 = vld [vmem:[%s2 + $0x28] sm:$0xff]
    %v53 = vld [vmem:[%s2 + $0x30] sm:$0xff]
    %v54 = vld [vmem:[%s2 + $0x38] sm:$0xff]
    %v55 = vld [vmem:[%s2 + $0x40] sm:$0xff]
    %v56 = vld [vmem:[%s2 + $0x48] sm:$0xff]
    %v57 = vld [vmem:[%s2 + $0x50] sm:$0xff]
    %v58 = vld [vmem:[%s2 + $0x58] sm:$0xff]
    %v59 = vld [vmem:[%s2 + $0x60] sm:$0xff]
    %v60 = vld [vmem:[%s2 + $0x68] sm:$0xff]
    %v61 = vld [vmem:[%s2 + $0x70] sm:$0xff]
    %v62 = vld [vmem:[%s2 + $0x78] sm:$0xff]
    %64 = vset.pattern.permute.xlu0 0
    %65 = vperm.xlu0 %64, %v47
    %v66 = vpop.permute.xlu0 %65
    %69 = vset.pattern.permute.xlu0 0
    %70 = vperm.xlu0 %69, %v48
    %v71 = vpop.permute.xlu0 %70
    %74 = vset.pattern.permute.xlu0 0
    %75 = vperm.xlu0 %74, %v49
    %v76 = vpop.permute.xlu0 %75
    %79 = vset.pattern.permute.xlu0 0
    %80 = vperm.xlu0 %79, %v50
    %v81 = vpop.permute.xlu0 %80
    %84 = vset.pattern.permute.xlu0 0
    %85 = vperm.xlu0 %84, %v51
    %v86 = vpop.permute.xlu0 %85
    %89 = vset.pattern.permute.xlu0 0
    %90 = vperm.xlu0 %89, %v52
    %v91 = vpop.permute.xlu0 %90
    %94 = vset.pattern.permute.xlu0 0
    %95 = vperm.xlu0 %94, %v53
    %v96 = vpop.permute.xlu0 %95
    %99 = vset.pattern.permute.xlu0 0
    %100 = vperm.xlu0 %99, %v54
    %v101 = vpop.permute.xlu0 %100
    %104 = vset.pattern.permute.xlu0 0
    %105 = vperm.xlu0 %104, %v55
    %v106 = vpop.permute.xlu0 %105
    %109 = vset.pattern.permute.xlu0 0
    %110 = vperm.xlu0 %109, %v56
    %v111 = vpop.permute.xlu0 %110
    %114 = vset.pattern.permute.xlu0 0
    %115 = vperm.xlu0 %114, %v57
    %v116 = vpop.permute.xlu0 %115
    %119 = vset.pattern.permute.xlu0 0
    %120 = vperm.xlu0 %119, %v58
    %v121 = vpop.permute.xlu0 %120
    %124 = vset.pattern.permute.xlu0 0
    %125 = vperm.xlu0 %124, %v59
    %v126 = vpop.permute.xlu0 %125
    %129 = vset.pattern.permute.xlu0 0
    %130 = vperm.xlu0 %129, %v60
    %v131 = vpop.permute.xlu0 %130
    %134 = vset.pattern.permute.xlu0 0
    %135 = vperm.xlu0 %134, %v61
    %v136 = vpop.permute.xlu0 %135
    %139 = vset.pattern.permute.xlu0 0
    %140 = vperm.xlu0 %139, %v62
    %v141 = vpop.permute.xlu0 %140
    %v159 = vunpack.c.l.b16 %v28
    %v160 = vunpack.c.l.b16 %v29
    %v161 = vunpack.c.l.b16 %v30
    %v162 = vunpack.c.l.b16 %v31
    %v163 = vunpack.c.l.b16 %v32
    %v164 = vunpack.c.l.b16 %v33
    %v165 = vunpack.c.l.b16 %v34
    %v166 = vunpack.c.l.b16 %v35
    %v167 = vunpack.c.l.b16 %v36
    %v168 = vunpack.c.l.b16 %v37
    %v169 = vunpack.c.l.b16 %v38
    %v170 = vunpack.c.l.b16 %v39
    %v171 = vunpack.c.l.b16 %v40
    %v172 = vunpack.c.l.b16 %v41
    %v173 = vunpack.c.l.b16 %v42
    %v174 = vunpack.c.l.b16 %v43
    %v175 = vpack.c.b16 %v160, %v159
    %v176 = vpack.c.b16 %v162, %v161
    %v177 = vpack.c.b16 %v164, %v163
    %v178 = vpack.c.b16 %v166, %v165
    %v179 = vpack.c.b16 %v168, %v167
    %v180 = vpack.c.b16 %v170, %v169
    %v181 = vpack.c.b16 %v172, %v171
    %v182 = vpack.c.b16 %v174, %v173
    %v186 = vunpack.c.l.b16 %v44
    %v187 = vunpack.c.l.b16 %v45
    %v188 = vunpack.c.l.b16 %v46
    %v189 = vpack.c.b16 %v187, %v186
    %v190 = vpack.c.b16 %v188, %v188
    %vm192 = vcmask 146432
    %v194 = vsel %vm192, %v175, 0
    %v197 = vsel %vm192, %v176, 0
    %v200 = vsel %vm192, %v177, 0
    %v203 = vsel %vm192, %v178, 0
    %v206 = vsel %vm192, %v179, 0
    %v209 = vsel %vm192, %v180, 0
    %v212 = vsel %vm192, %v181, 0
    %v215 = vsel %vm192, %v182, 0
    %vm217 = vcmask 1040384
    %v219 = vsel %vm217, %v190, 0
    %221 = vmatprep.subr.bf16.mxu0 0
    %222 = vmatpush1.bf16.msra.mxu0 %v189
    %223 = vmatprep.subr.bf16.mxu0 0
    %224 = vmatpush1.bf16.msra.mxu0 %v219
    %225 = vmatprep.subr.bf16.mxu0 0
    %226 = vmatpush1.bf16.msra.mxu0 0
    %227 = vmatprep.subr.bf16.mxu0 0
    %228 = vmatpush1.bf16.msra.mxu0 0
    %229 = vmatprep.subr.bf16.mxu0 0
    %230 = vmatpush1.bf16.msra.mxu0 0
    %231 = vmatprep.subr.bf16.mxu0 0
    %232 = vmatpush1.bf16.msra.mxu0 0
    %233 = vmatprep.subr.bf16.mxu0 0
    %234 = vmatpush1.bf16.msra.mxu0 0
    %235 = vmatprep.subr.bf16.mxu0 0
    %236 = vmatpush1.bf16.msra.mxu0 0
    %237 = vmatprep.subr.bf16.mxu0 0
    %238 = vmatpush1.bf16.msra.mxu0 0
    %239 = vmatprep.subr.bf16.mxu0 0
    %240 = vmatpush1.bf16.msra.mxu0 0
    %241 = vmatprep.subr.bf16.mxu0 0
    %242 = vmatpush1.bf16.msra.mxu0 0
    %243 = vmatprep.subr.bf16.mxu0 0
    %244 = vmatpush1.bf16.msra.mxu0 0
    %245 = vmatprep.subr.bf16.mxu0 0
    %246 = vmatpush1.bf16.msra.mxu0 0
    %247 = vmatprep.subr.bf16.mxu0 0
    %248 = vmatpush1.bf16.msra.mxu0 0
    %249 = vmatprep.subr.bf16.mxu0 0
    %250 = vmatpush1.bf16.msra.mxu0 0
    %251 = vmatprep.subr.bf16.mxu0 0
    %252 = vmatpush1.bf16.msra.mxu0 0
    %253 = vmatprep.mubr.bf16.mxu0 0
    %254 = vmatmul.mubr.bf16.gmra.mrb[0].mxu0 %v194
    %v255 = vpop.f32.mrb[0].mxu0
    %v256 = vadd.f32 %v66, %v255
    %v257 = vpop.f32.mrb[0].mxu0
    %v258 = vpop.f32.mrb[0].mxu0
    %v259 = vadd.f32 %v71, %v258
    %v260 = vpop.f32.mrb[0].mxu0
    %261 = vmatprep.mubr.bf16.mxu0 0
    %262 = vmatmul.mubr.bf16.gmra.mrb[0].mxu0 %v197
    %v263 = vpop.f32.mrb[0].mxu0
    %v264 = vadd.f32 %v76, %v263
    %v265 = vpop.f32.mrb[0].mxu0
    %v266 = vpop.f32.mrb[0].mxu0
    %v267 = vadd.f32 %v81, %v266
    %v268 = vpop.f32.mrb[0].mxu0
    %269 = vmatprep.mubr.bf16.mxu0 0
    %270 = vmatmul.mubr.bf16.gmra.mrb[0].mxu0 %v200
    %v271 = vpop.f32.mrb[0].mxu0
    %v272 = vadd.f32 %v86, %v271
    %v273 = vpop.f32.mrb[0].mxu0
    %v274 = vpop.f32.mrb[0].mxu0
    %v275 = vadd.f32 %v91, %v274
    %v276 = vpop.f32.mrb[0].mxu0
    %277 = vmatprep.mubr.bf16.mxu0 0
    %278 = vmatmul.mubr.bf16.gmra.mrb[0].mxu0 %v203
    %v279 = vpop.f32.mrb[0].mxu0
    %v280 = vadd.f32 %v96, %v279
    %v281 = vpop.f32.mrb[0].mxu0
    %v282 = vpop.f32.mrb[0].mxu0
    %v283 = vadd.f32 %v101, %v282
    %v284 = vpop.f32.mrb[0].mxu0
    %285 = vmatprep.mubr.bf16.mxu0 0
    %286 = vmatmul.mubr.bf16.gmra.mrb[0].mxu0 %v206
    %v287 = vpop.f32.mrb[0].mxu0
    %v288 = vadd.f32 %v106, %v287
    %v289 = vpop.f32.mrb[0].mxu0
    %v290 = vpop.f32.mrb[0].mxu0
    %v291 = vadd.f32 %v111, %v290
    %v292 = vpop.f32.mrb[0].mxu0
    %293 = vmatprep.mubr.bf16.mxu0 0
    %294 = vmatmul.mubr.bf16.gmra.mrb[0].mxu0 %v209
    %v295 = vpop.f32.mrb[0].mxu0
    %v296 = vadd.f32 %v116, %v295
    %v297 = vpop.f32.mrb[0].mxu0
    %v298 = vpop.f32.mrb[0].mxu0
    %v299 = vadd.f32 %v121, %v298
    %v300 = vpop.f32.mrb[0].mxu0
    %301 = vmatprep.mubr.bf16.mxu0 0
    %302 = vmatmul.mubr.bf16.gmra.mrb[0].mxu0 %v212
    %v303 = vpop.f32.mrb[0].mxu0
    %v304 = vadd.f32 %v126, %v303
    %v305 = vpop.f32.mrb[0].mxu0
    %v306 = vpop.f32.mrb[0].mxu0
    %v307 = vadd.f32 %v131, %v306
    %v308 = vpop.f32.mrb[0].mxu0
    %309 = vmatprep.mubr.bf16.mxu0 0
    %310 = vmatmul.mubr.bf16.gmra.mrb[0].mxu0 %v215
    %v311 = vpop.f32.mrb[0].mxu0
    %v312 = vadd.f32 %v136, %v311
    %v313 = vpop.f32.mrb[0].mxu0
    %v314 = vpop.f32.mrb[0].mxu0
    %v315 = vadd.f32 %v141, %v314
    %v316 = vpop.f32.mrb[0].mxu0
    %317 = vdwg.mxu0
    %v318 = vmax.f32 %v256, 0.0
    %v319 = vmax.f32 %v259, 0.0
    %v320 = vmax.f32 %v264, 0.0
    %v321 = vmax.f32 %v267, 0.0
    %v322 = vmax.f32 %v272, 0.0
    %v323 = vmax.f32 %v275, 0.0
    %v324 = vmax.f32 %v280, 0.0
    %v325 = vmax.f32 %v283, 0.0
    %v326 = vmax.f32 %v288, 0.0
    %v327 = vmax.f32 %v291, 0.0
    %v328 = vmax.f32 %v296, 0.0
    %v329 = vmax.f32 %v299, 0.0
    %v330 = vmax.f32 %v304, 0.0
    %v331 = vmax.f32 %v307, 0.0
    %v332 = vmax.f32 %v312, 0.0
    %v333 = vmax.f32 %v315, 0.0
    %v334 = vld [vmem:[%s3] sm:$0xf]
    %v335 = vld [vmem:[%s3 + $0x4] sm:$0xf]
    %v336 = vld [vmem:[%s3 + $0x8] sm:$0xf]
    %v337 = vld [vmem:[%s3 + $0xc] sm:$0xf]
    %v338 = vld [vmem:[%s3 + $0x10] sm:$0xf]
    %v339 = vld [vmem:[%s3 + $0x14] sm:$0xf]
    %v340 = vld [vmem:[%s3 + $0x18] sm:$0xf]
    %v341 = vld [vmem:[%s3 + $0x1c] sm:$0xf]
    %v342 = vld [vmem:[%s3 + $0x20] sm:$0xf]
    %v343 = vld [vmem:[%s3 + $0x24] sm:$0xf]
    %v344 = vld [vmem:[%s3 + $0x28] sm:$0xf]
    %v345 = vld [vmem:[%s3 + $0x2c] sm:$0xf]
    %v346 = vld [vmem:[%s3 + $0x30] sm:$0xf]
    %v347 = vld [vmem:[%s3 + $0x34] sm:$0xf]
    %v348 = vld [vmem:[%s3 + $0x38] sm:$0xf]
    %v349 = vld [vmem:[%s3 + $0x3c] sm:$0xf]
    %v350 = vpack.c.bf16 %v319, %v318
    %v351 = vpack.c.bf16 %v321, %v320
    %v352 = vpack.c.bf16 %v323, %v322
    %v353 = vpack.c.bf16 %v325, %v324
    %v354 = vpack.c.bf16 %v327, %v326
    %v355 = vpack.c.bf16 %v329, %v328
    %v356 = vpack.c.bf16 %v331, %v330
    %v357 = vpack.c.bf16 %v333, %v332
    %v358 = vld [vmem:[%s4] sm:$0xff]
    %v359 = vld [vmem:[%s4 + $0x8] sm:$0xff]
    %v360 = vld [vmem:[%s4 + $0x10] sm:$0xff]
    %v361 = vld [vmem:[%s4 + $0x18] sm:$0xff]
    %v362 = vld [vmem:[%s4 + $0x20] sm:$0xff]
    %v363 = vld [vmem:[%s4 + $0x28] sm:$0xff]
    %v364 = vld [vmem:[%s4 + $0x30] sm:$0xff]
    %v365 = vld [vmem:[%s4 + $0x38] sm:$0xff]
    %v366 = vld [vmem:[%s4 + $0x40] sm:$0xff]
    %v367 = vld [vmem:[%s4 + $0x48] sm:$0xff]
    %v368 = vld [vmem:[%s4 + $0x50] sm:$0xff]
    %v369 = vld [vmem:[%s4 + $0x58] sm:$0xff]
    %v370 = vld [vmem:[%s4 + $0x60] sm:$0xff]
    %v371 = vld [vmem:[%s4 + $0x68] sm:$0xff]
    %v372 = vld [vmem:[%s4 + $0x70] sm:$0xff]
    %v373 = vld [vmem:[%s4 + $0x78] sm:$0xff]
    %375 = vset.pattern.permute.xlu0 0
    %376 = vperm.xlu0 %375, %v358
    %v377 = vpop.permute.xlu0 %376
    %380 = vset.pattern.permute.xlu0 0
    %381 = vperm.xlu0 %380, %v359
    %v382 = vpop.permute.xlu0 %381
    %385 = vset.pattern.permute.xlu0 0
    %386 = vperm.xlu0 %385, %v360
    %v387 = vpop.permute.xlu0 %386
    %390 = vset.pattern.permute.xlu0 0
    %391 = vperm.xlu0 %390, %v361
    %v392 = vpop.permute.xlu0 %391
    %395 = vset.pattern.permute.xlu0 0
    %396 = vperm.xlu0 %395, %v362
    %v397 = vpop.permute.xlu0 %396
    %400 = vset.pattern.permute.xlu0 0
    %401 = vperm.xlu0 %400, %v363
    %v402 = vpop.permute.xlu0 %401
    %405 = vset.pattern.permute.xlu0 0
    %406 = vperm.xlu0 %405, %v364
    %v407 = vpop.permute.xlu0 %406
    %410 = vset.pattern.permute.xlu0 0
    %411 = vperm.xlu0 %410, %v365
    %v412 = vpop.permute.xlu0 %411
    %415 = vset.pattern.permute.xlu0 0
    %416 = vperm.xlu0 %415, %v366
    %v417 = vpop.permute.xlu0 %416
    %420 = vset.pattern.permute.xlu0 0
    %421 = vperm.xlu0 %420, %v367
    %v422 = vpop.permute.xlu0 %421
    %425 = vset.pattern.permute.xlu0 0
    %426 = vperm.xlu0 %425, %v368
    %v427 = vpop.permute.xlu0 %426
    %430 = vset.pattern.permute.xlu0 0
    %431 = vperm.xlu0 %430, %v369
    %v432 = vpop.permute.xlu0 %431
    %435 = vset.pattern.permute.xlu0 0
    %436 = vperm.xlu0 %435, %v370
    %v437 = vpop.permute.xlu0 %436
    %440 = vset.pattern.permute.xlu0 0
    %441 = vperm.xlu0 %440, %v371
    %v442 = vpop.permute.xlu0 %441
    %445 = vset.pattern.permute.xlu0 0
    %446 = vperm.xlu0 %445, %v372
    %v447 = vpop.permute.xlu0 %446
    %450 = vset.pattern.permute.xlu0 0
    %451 = vperm.xlu0 %450, %v373
    %v452 = vpop.permute.xlu0 %451
    %v470 = vunpack.c.l.b16 %v334
    %v471 = vunpack.c.l.b16 %v335
    %v472 = vunpack.c.l.b16 %v336
    %v473 = vunpack.c.l.b16 %v337
    %v474 = vunpack.c.l.b16 %v338
    %v475 = vunpack.c.l.b16 %v339
    %v476 = vunpack.c.l.b16 %v340
    %v477 = vunpack.c.l.b16 %v341
    %v478 = vunpack.c.l.b16 %v342
    %v479 = vunpack.c.l.b16 %v343
    %v480 = vunpack.c.l.b16 %v344
    %v481 = vunpack.c.l.b16 %v345
    %v482 = vunpack.c.l.b16 %v346
    %v483 = vunpack.c.l.b16 %v347
    %v484 = vunpack.c.l.b16 %v348
    %v485 = vunpack.c.l.b16 %v349
    %v486 = vpack.c.b16 %v471, %v470
    %v487 = vpack.c.b16 %v473, %v472
    %v488 = vpack.c.b16 %v475, %v474
    %v489 = vpack.c.b16 %v477, %v476
    %v490 = vpack.c.b16 %v479, %v478
    %v491 = vpack.c.b16 %v481, %v480
    %v492 = vpack.c.b16 %v483, %v482
    %v493 = vpack.c.b16 %v485, %v484
    %502 = vmatprep.subr.bf16.mxu0 0
    %503 = vmatpush1.bf16.msra.mxu0 %v350
    %504 = vmatprep.subr.bf16.mxu0 0
    %505 = vmatpush1.bf16.msra.mxu0 %v351
    %506 = vmatprep.subr.bf16.mxu0 0
    %507 = vmatpush1.bf16.msra.mxu0 %v352
    %508 = vmatprep.subr.bf16.mxu0 0
    %509 = vmatpush1.bf16.msra.mxu0 %v353
    %510 = vmatprep.subr.bf16.mxu0 0
    %511 = vmatpush1.bf16.msra.mxu0 %v354
    %512 = vmatprep.subr.bf16.mxu0 0
    %513 = vmatpush1.bf16.msra.mxu0 %v355
    %514 = vmatprep.subr.bf16.mxu0 0
    %515 = vmatpush1.bf16.msra.mxu0 %v356
    %516 = vmatprep.subr.bf16.mxu0 0
    %517 = vmatpush1.bf16.msra.mxu0 %v357
    %518 = vmatprep.subr.bf16.mxu0 0
    %519 = vmatpush1.bf16.msra.mxu0 0
    %520 = vmatprep.subr.bf16.mxu0 0
    %521 = vmatpush1.bf16.msra.mxu0 0
    %522 = vmatprep.subr.bf16.mxu0 0
    %523 = vmatpush1.bf16.msra.mxu0 0
    %524 = vmatprep.subr.bf16.mxu0 0
    %525 = vmatpush1.bf16.msra.mxu0 0
    %526 = vmatprep.subr.bf16.mxu0 0
    %527 = vmatpush1.bf16.msra.mxu0 0
    %528 = vmatprep.subr.bf16.mxu0 0
    %529 = vmatpush1.bf16.msra.mxu0 0
    %530 = vmatprep.subr.bf16.mxu0 0
    %531 = vmatpush1.bf16.msra.mxu0 0
    %532 = vmatprep.subr.bf16.mxu0 0
    %533 = vmatpush1.bf16.msra.mxu0 0
    %534 = vmatprep.mubr.bf16.mxu0 0
    %535 = vmatmul.mubr.bf16.gmra.mrb[0].mxu0 %v486
    %v536 = vpop.f32.mrb[0].mxu0
    %v537 = vadd.f32 %v377, %v536
    %v538 = vpop.f32.mrb[0].mxu0
    %v539 = vpop.f32.mrb[0].mxu0
    %v540 = vadd.f32 %v382, %v539
    %v541 = vpop.f32.mrb[0].mxu0
    %542 = vmatprep.mubr.bf16.mxu0 0
    %543 = vmatmul.mubr.bf16.gmra.mrb[0].mxu0 %v487
    %v544 = vpop.f32.mrb[0].mxu0
    %v545 = vadd.f32 %v387, %v544
    %v546 = vpop.f32.mrb[0].mxu0
    %v547 = vpop.f32.mrb[0].mxu0
    %v548 = vadd.f32 %v392, %v547
    %v549 = vpop.f32.mrb[0].mxu0
    %550 = vmatprep.mubr.bf16.mxu0 0
    %551 = vmatmul.mubr.bf16.gmra.mrb[0].mxu0 %v488
    %v552 = vpop.f32.mrb[0].mxu0
    %v553 = vadd.f32 %v397, %v552
    %v554 = vpop.f32.mrb[0].mxu0
    %v555 = vpop.f32.mrb[0].mxu0
    %v556 = vadd.f32 %v402, %v555
    %v557 = vpop.f32.mrb[0].mxu0
    %558 = vmatprep.mubr.bf16.mxu0 0
    %559 = vmatmul.mubr.bf16.gmra.mrb[0].mxu0 %v489
    %v560 = vpop.f32.mrb[0].mxu0
    %v561 = vadd.f32 %v407, %v560
    %v562 = vpop.f32.mrb[0].mxu0
    %v563 = vpop.f32.mrb[0].mxu0
    %v564 = vadd.f32 %v412, %v563
    %v565 = vpop.f32.mrb[0].mxu0
    %566 = vmatprep.mubr.bf16.mxu0 0
    %567 = vmatmul.mubr.bf16.gmra.mrb[0].mxu0 %v490
    %v568 = vpop.f32.mrb[0].mxu0
    %v569 = vadd.f32 %v417, %v568
    %v570 = vpop.f32.mrb[0].mxu0
    %v571 = vpop.f32.mrb[0].mxu0
    %v572 = vadd.f32 %v422, %v571
    %v573 = vpop.f32.mrb[0].mxu0
    %574 = vmatprep.mubr.bf16.mxu0 0
    %575 = vmatmul.mubr.bf16.gmra.mrb[0].mxu0 %v491
    %v576 = vpop.f32.mrb[0].mxu0
    %v577 = vadd.f32 %v427, %v576
    %v578 = vpop.f32.mrb[0].mxu0
    %v579 = vpop.f32.mrb[0].mxu0
    %v580 = vadd.f32 %v432, %v579
    %v581 = vpop.f32.mrb[0].mxu0
    %582 = vmatprep.mubr.bf16.mxu0 0
    %583 = vmatmul.mubr.bf16.gmra.mrb[0].mxu0 %v492
    %v584 = vpop.f32.mrb[0].mxu0
    %v585 = vadd.f32 %v437, %v584
    %v586 = vpop.f32.mrb[0].mxu0
    %v587 = vpop.f32.mrb[0].mxu0
    %v588 = vadd.f32 %v442, %v587
    %v589 = vpop.f32.mrb[0].mxu0
    %590 = vmatprep.mubr.bf16.mxu0 0
    %591 = vmatmul.mubr.bf16.gmra.mrb[0].mxu0 %v493
    %v592 = vpop.f32.mrb[0].mxu0
    %v593 = vadd.f32 %v447, %v592
    %v594 = vpop.f32.mrb[0].mxu0
    %v595 = vpop.f32.mrb[0].mxu0
    %v596 = vadd.f32 %v452, %v595
    %v597 = vpop.f32.mrb[0].mxu0
    %598 = vdwg.mxu0
    %v599 = vmax.f32 %v537, 0.0
    %v600 = vmax.f32 %v540, 0.0
    %v601 = vmax.f32 %v545, 0.0
    %v602 = vmax.f32 %v548, 0.0
    %v603 = vmax.f32 %v553, 0.0
    %v604 = vmax.f32 %v556, 0.0
    %v605 = vmax.f32 %v561, 0.0
    %v606 = vmax.f32 %v564, 0.0
    %v607 = vmax.f32 %v569, 0.0
    %v608 = vmax.f32 %v572, 0.0
    %v609 = vmax.f32 %v577, 0.0
    %v610 = vmax.f32 %v580, 0.0
    %v611 = vmax.f32 %v585, 0.0
    %v612 = vmax.f32 %v588, 0.0
    %v613 = vmax.f32 %v593, 0.0
    %v614 = vmax.f32 %v596, 0.0
    %v615 = vld [vmem:[%s5] sm:$0xf]
    %v616 = vld [vmem:[%s5 + $0x4] sm:$0x1]
    %v617 = vpack.c.bf16 %v600, %v599
    %v618 = vpack.c.bf16 %v602, %v601
    %v619 = vpack.c.bf16 %v604, %v603
    %v620 = vpack.c.bf16 %v606, %v605
    %v621 = vpack.c.bf16 %v608, %v607
    %v622 = vpack.c.bf16 %v610, %v609
    %v623 = vpack.c.bf16 %v612, %v611
    %v624 = vpack.c.bf16 %v614, %v613
    %v625 = vld [vmem:[%s6] sm:$0xff]
    %v626 = vld [vmem:[%s6 + $0x8] sm:$0x1]
    %628 = vset.pattern.permute.xlu0 0
    %629 = vperm.xlu0 %628, %v625
    %v630 = vpop.permute.xlu0 %629
    %633 = vset.pattern.permute.xlu0 0
    %634 = vperm.xlu0 %633, %v626
    %v635 = vpop.permute.xlu0 %634
    %v639 = vunpack.c.l.b16 %v615
    %v640 = vunpack.c.l.b16 %v616
    %v641 = vpack.c.b16 %v640, %v639
    %643 = vmatprep.subr.bf16.mxu0 0
    %644 = vmatpush1.bf16.msra.mxu0 %v617
    %645 = vmatprep.subr.bf16.mxu0 0
    %646 = vmatpush1.bf16.msra.mxu0 %v618
    %647 = vmatprep.subr.bf16.mxu0 0
    %648 = vmatpush1.bf16.msra.mxu0 %v619
    %649 = vmatprep.subr.bf16.mxu0 0
    %650 = vmatpush1.bf16.msra.mxu0 %v620
    %651 = vmatprep.subr.bf16.mxu0 0
    %652 = vmatpush1.bf16.msra.mxu0 %v621
    %653 = vmatprep.subr.bf16.mxu0 0
    %654 = vmatpush1.bf16.msra.mxu0 %v622
    %655 = vmatprep.subr.bf16.mxu0 0
    %656 = vmatpush1.bf16.msra.mxu0 %v623
    %657 = vmatprep.subr.bf16.mxu0 0
    %658 = vmatpush1.bf16.msra.mxu0 %v624
    %659 = vmatprep.subr.bf16.mxu0 0
    %660 = vmatpush1.bf16.msra.mxu0 0
    %661 = vmatprep.subr.bf16.mxu0 0
    %662 = vmatpush1.bf16.msra.mxu0 0
    %663 = vmatprep.subr.bf16.mxu0 0
    %664 = vmatpush1.bf16.msra.mxu0 0
    %665 = vmatprep.subr.bf16.mxu0 0
    %666 = vmatpush1.bf16.msra.mxu0 0
    %667 = vmatprep.subr.bf16.mxu0 0
    %668 = vmatpush1.bf16.msra.mxu0 0
    %669 = vmatprep.subr.bf16.mxu0 0
    %670 = vmatpush1.bf16.msra.mxu0 0
    %671 = vmatprep.subr.bf16.mxu0 0
    %672 = vmatpush1.bf16.msra.mxu0 0
    %673 = vmatprep.subr.bf16.mxu0 0
    %674 = vmatpush1.bf16.msra.mxu0 0
    %675 = vmatprep.mubr.bf16.mxu0 0
    %676 = vmatmul.mubr.bf16.gmra.mrb[0].mxu0 %v641
    %v677 = vpop.f32.mrb[0].mxu0
    %v678 = vadd.f32 %v630, %v677
    %v679 = vpop.f32.mrb[0].mxu0
    %v680 = vpop.f32.mrb[0].mxu0
    %v681 = vadd.f32 %v635, %v680
    %v682 = vpop.f32.mrb[0].mxu0
    %683 = vdwg.mxu0
    %684 = vst [vmem:[#allocation2] sm:$0xff] %v678
    %685 = vst [vmem:[#allocation2 + $0x8] sm:$0x1] %v681
    // Predicated region
    $region30: #{tpu_custom_call.1} parent=1 // pred_check
      _
    $region31: #{tpu_custom_call.1} parent=1 // pred_check_branch
      %687 = sbr.rel (0) target = $region33
    $region32: #{tpu_custom_call.1} parent=1 // pred_region
      %s689 = ssub.s32 256, 256
      %690 = vsyncadd [#allocation3], %s689
      %s691 = sshll.u32 [#allocation2], 4
      %s692 = int_to_ptr.vmem [resolvable:$true] %s691
      %697 = dma.vmem_to_hbm [thread:$0]  %s692, 256, %s7, [#allocation3], 128, 128, 8
    $region33: #{tpu_custom_call.1} parent=1 // pred_fallthru
      _
    // Predicated region
    $region34: #{tpu_custom_call.1} parent=1 // pred_check
      _
    $region35: #{tpu_custom_call.1} parent=1 // pred_check_branch
      %699 = sbr.rel (0) target = $region37
    $region36: #{tpu_custom_call.1} parent=1 // pred_region
      %700 = dma.done [#allocation3], 256
    $region37: #{tpu_custom_call.1} parent=1 // pred_fallthru
      _
    %701 = vsyncpa [#allocation3], 1

</llo_original>
